<compile_context>
chip_gen: v7x
topology: tpu7x:2x2x1
jax: 0.10.0
libtpu: 0.0.40
codegen_flags: <defaults>
</compile_context>

<pallas_src>
import jax
import jax.numpy as jnp
from jax.experimental import pallas as pl
from jax.experimental.pallas import tpu as pltpu


def _ceil_to(x, m):
    return (x + m - 1) // m * m


def twgcn_kernel(agg_ref, mn_ref, wg_ref, bg_ref, w1_ref, b1_ref, out_ref):
    """Fused WGCN layer + masked-mean pooling + fc1 classifier (one batch tile).

    agg_ref : [Bt*S, E]  x + dep_w * x[head]  (sparse graph aggregation), bf16/f32
    mn_ref  : [Bt, Bt*S] block-diagonal pooling weights (mask/len), f32
    wg_ref  : [E, H]     GCN projection weight, bf16/f32
    bg_ref  : [1, H]     GCN bias, f32
    w1_ref  : [H, L]     fc1 weight, f32
    b1_ref  : [1, L]     fc1 bias, f32
    out_ref : [Bt, L]    logits, f32
    """
    # GCN projection as one flat GEMM [Bt*S, E] @ [E, H] (f32 accumulate).
    h = jnp.dot(agg_ref[...], wg_ref[...], preferred_element_type=jnp.float32)
    h = jnp.maximum(h + bg_ref[...], 0.0)                            # f32 VPU

    # Masked mean pooling as a block-diagonal matmul: [Bt, Bt*S] @ [Bt*S, H].
    pooled = jnp.dot(mn_ref[...], h, preferred_element_type=jnp.float32)

    # fc1 head: [Bt, H] @ [H, L] + b1.
    logits = jnp.dot(pooled, w1_ref[...],
                     preferred_element_type=jnp.float32) + b1_ref[...]
    out_ref[...] = logits.astype(out_ref.dtype)


def twgcn_forward(input_ids, head_ids, segment_ids, input_mask, dep_ids,
                  params, *, batch_tile=8, use_bf16=True):
    """Wrapper: embedding/edge gathers + padding, then the gridded Pallas kernel."""
    B, S = input_ids.shape
    word_emb = params["word_emb"]        # [V, E]
    seg_emb = params["seg_emb"]          # [2, E]
    dep_weight = params["dep_weight"]    # [D]
    wg, bg = params["wg"], params["bg"]  # [E, H], [1, H]
    w1, b1 = params["w1"], params["b1"]  # [H, L], [1, L]
    E, H = wg.shape
    L = w1.shape[1]

    mask_f = input_mask.astype(jnp.float32)                  # [B, S]

    # Token representations (masked).
    x = word_emb[input_ids] + seg_emb[segment_ids]           # [B, S, E]
    x = x * mask_f[..., None]

    # Sparse graph aggregation (<=2 nonzeros per adjacency row:
    # self loop + head edge) -> no dense [B,S,S] adjacency ever exists.
    # The multiply/add fuse into the XLA gather that builds x_head, so the
    # kernel reads a single [B*S, E] operand.
    dep_w = dep_weight[dep_ids] * mask_f                     # [B, S]
    x_head = x[jnp.arange(B)[:, None], head_ids]             # [B, S, E]
    agg = x + dep_w[..., None] * x_head                      # [B, S, E]

    # Masked-mean weights with 1/len folded in (clamped to avoid 0-div on
    # fully padded rows).
    denom = jnp.maximum(jnp.sum(mask_f, axis=1, keepdims=True), 1.0)
    mask_norm = mask_f / denom                               # [B, S]

    # ---- pad to TPU-friendly shapes (lane=128, sublane=8) ----
    Bt = max(8, _ceil_to(batch_tile, 8))
    B_pad = _ceil_to(max(B, Bt), Bt)
    S_pad = _ceil_to(S, 8)
    E_pad = _ceil_to(E, 128)
    H_pad = _ceil_to(H, 128)
    L_pad = _ceil_to(L, 128)

    def pad2(a, r, c):
        return jnp.pad(a, ((0, r - a.shape[0]), (0, c - a.shape[1])))

    def pad3(a, b_, s_, e_):
        return jnp.pad(a, ((0, b_ - a.shape[0]), (0, s_ - a.shape[1]),
                           (0, e_ - a.shape[2])))

    agg_p = pad3(agg, B_pad, S_pad, E_pad)
    mn_p = pad2(mask_norm, B_pad, S_pad)
    wg_p = pad2(wg, E_pad, H_pad)
    bg_p = pad2(bg, 1, H_pad)
    w1_p = pad2(w1, H_pad, L_pad)
    b1_p = pad2(b1, 1, L_pad)

    # Block-diagonal pooling weights: within a batch tile of Bt examples,
    # row r holds mask_norm of example r in columns [r*S_pad, (r+1)*S_pad).
    # Padded rows/columns carry zero weight, so padding never leaks into the
    # pooled features.
    slot = jax.nn.one_hot(jnp.arange(B_pad) % Bt, Bt, dtype=jnp.float32)
    mn_bd = (slot[:, :, None] * mn_p[:, None, :]).reshape(B_pad, Bt * S_pad)

    mxu_dtype = jnp.bfloat16 if use_bf16 else jnp.float32
    rows = Bt * S_pad
    agg2 = agg_p.reshape(B_pad * S_pad, E_pad).astype(mxu_dtype)
    wg_p = wg_p.astype(mxu_dtype)

    grid = (B_pad // Bt,)
    out = pl.pallas_call(
        twgcn_kernel,
        out_shape=jax.ShapeDtypeStruct((B_pad, L_pad), jnp.float32),
        grid=grid,
        in_specs=[
            pl.BlockSpec((rows, E_pad), lambda i: (i, 0)),    # agg (per tile)
            pl.BlockSpec((Bt, rows), lambda i: (i, 0)),       # pooling weights
            pl.BlockSpec((E_pad, H_pad), lambda i: (0, 0)),   # wg (resident)
            pl.BlockSpec((1, H_pad), lambda i: (0, 0)),       # bg
            pl.BlockSpec((H_pad, L_pad), lambda i: (0, 0)),   # w1
            pl.BlockSpec((1, L_pad), lambda i: (0, 0)),       # b1
        ],
        out_specs=pl.BlockSpec((Bt, L_pad), lambda i: (i, 0)),
        compiler_params=pltpu.CompilerParams(
            dimension_semantics=("parallel",)),
    )(agg2, mn_bd, wg_p, bg_p, w1_p, b1_p)

    return out[:B, :L]


def reference_forward(input_ids, head_ids, segment_ids, input_mask, dep_ids,
                      params):
    """Pure-JAX reference with the original dense-adjacency formulation."""
    mask_f = input_mask.astype(jnp.float32)
    x = params["word_emb"][input_ids] + params["seg_emb"][segment_ids]
    x = x * mask_f[..., None]
    B, S = input_ids.shape
    dep_w = params["dep_weight"][dep_ids] * mask_f
    adj = jnp.zeros((B, S, S), jnp.float32)
    adj = adj.at[jnp.arange(B)[:, None], jnp.arange(S)[None, :],
                 head_ids].add(dep_w)
    adj = adj + jnp.eye(S, dtype=jnp.float32)[None]
    agg = jnp.einsum("bij,bjd->bid", adj, x)
    h = jnp.maximum(jnp.einsum("bid,dh->bih", agg, params["wg"])
                    + params["bg"], 0.0)
    h = h * mask_f[..., None]
    denom = jnp.maximum(jnp.sum(mask_f, axis=1, keepdims=True), 1.0)
    pooled = jnp.sum(h, axis=1) / denom
    return pooled @ params["w1"] + params["b1"]


if __name__ == "__main__":
    # Small, module-consistent shapes.
    B, S = 2, 8              # batch, sequence length
    V, E = 32, 32            # vocab size, embedding dim
    H = 32                   # args.wgcn_hidden_dim (SharedLayer output dim)
    L = 4                    # args.num_labels
    D = 16                   # number of dependency relation types

    key = jax.random.PRNGKey(0)
    keys = jax.random.split(key, 10)

    params = {
        "word_emb":  0.02 * jax.random.normal(keys[0], (V, E), jnp.float32),
        "seg_emb":   0.02 * jax.random.normal(keys[1], (2, E), jnp.float32),
        "dep_weight": jax.random.uniform(keys[2], (D,), jnp.float32,
                                         minval=0.1, maxval=1.0),
        "wg": 0.1 * jax.random.normal(keys[3], (E, H), jnp.float32),
        "bg": 0.1 * jax.random.normal(keys[4], (1, H), jnp.float32),
        "w1": 0.1 * jax.random.normal(keys[5], (H, L), jnp.float32),
        "b1": 0.1 * jax.random.normal(keys[6], (1, L), jnp.float32),
    }

    input_ids = jax.random.randint(keys[7], (B, S), 0, V, jnp.int32)
    head_ids = jax.random.randint(keys[8], (B, S), 0, S, jnp.int32)
    dep_ids = jax.random.randint(keys[9], (B, S), 0, D, jnp.int32)
    segment_ids = jnp.zeros((B, S), jnp.int32).at[:, S // 2:].set(1)
    # Simple attention mask: second example has two padding positions.
    input_mask = jnp.ones((B, S), jnp.int32).at[1, S - 2:].set(0)

    ref = reference_forward(input_ids, head_ids, segment_ids, input_mask,
                            dep_ids, params)

    # f32 MXU path: should match the reference tightly.
    logits_f32 = twgcn_forward(input_ids, head_ids, segment_ids, input_mask,
                               dep_ids, params, use_bf16=False)
    logits_f32 = jax.block_until_ready(logits_f32)
    assert logits_f32.shape == (B, L)
    assert jnp.allclose(logits_f32, ref, atol=1e-4, rtol=1e-4)

    # bf16 MXU path (default, recommended on v6e/v7x): small quantization error.
    logits_bf16 = twgcn_forward(input_ids, head_ids, segment_ids, input_mask,
                                dep_ids, params, use_bf16=True)
    logits_bf16 = jax.block_until_ready(logits_bf16)
    assert logits_bf16.shape == (B, L)
    assert jnp.allclose(logits_bf16, ref, atol=2e-2, rtol=2e-2)

    print("KERNEL_OK")
</pallas_src>

<mosaic_0001>
module attributes {stable_mosaic.version = 11 : i64} {
  func.func @twgcn_kernel(%arg0: i32, %arg1: memref<64x128xf32, #tpu.memory_space<vmem>>, %arg2: memref<8x64xf32, #tpu.memory_space<vmem>>, %arg3: memref<128x128xf32, #tpu.memory_space<vmem>>, %arg4: memref<1x128xf32, #tpu.memory_space<vmem>>, %arg5: memref<128x128xf32, #tpu.memory_space<vmem>>, %arg6: memref<1x128xf32, #tpu.memory_space<vmem>>, %arg7: memref<8x128xf32, #tpu.memory_space<vmem>>) attributes {dimension_semantics = [#tpu.dimension_semantics<parallel>], iteration_bounds = array<i64: 1>, scalar_prefetch = 0 : i64, scratch_operands = 0 : i64, tpu.core_type = #tpu.core_type<tc>, window_params = [{transform_indices = @transform_0, window_bounds = array<i64: 64, 128>}, {transform_indices = @transform_1, window_bounds = array<i64: 8, 64>}, {pipeline_mode = #tpu.pipeline_mode<synchronous>, transform_indices = @transform_2, window_bounds = array<i64: 128, 128>}, {pipeline_mode = #tpu.pipeline_mode<synchronous>, transform_indices = @transform_3, window_bounds = array<i64: 1, 128>}, {pipeline_mode = #tpu.pipeline_mode<synchronous>, transform_indices = @transform_4, window_bounds = array<i64: 128, 128>}, {pipeline_mode = #tpu.pipeline_mode<synchronous>, transform_indices = @transform_5, window_bounds = array<i64: 1, 128>}, {transform_indices = @transform_6, window_bounds = array<i64: 8, 128>}]} {
    %c0 = arith.constant 0 : index
    %c0_0 = arith.constant 0 : index
    %0 = vector.load %arg1[%c0, %c0_0] : memref<64x128xf32, #tpu.memory_space<vmem>>, vector<64x128xf32>
    %c0_1 = arith.constant 0 : index
    %c0_2 = arith.constant 0 : index
    %1 = vector.load %arg3[%c0_1, %c0_2] : memref<128x128xf32, #tpu.memory_space<vmem>>, vector<128x128xf32>
    %cst = arith.constant dense<0.000000e+00> : vector<64x128xf32>
    %2 = tpu.matmul %0, %1, %cst {dimension_numbers = #tpu.dot_dimension_numbers<[1], [0], [0], [1], [0, 0, 1, 1], [], []>} : vector<64x128xf32>, vector<128x128xf32>, vector<64x128xf32> -> vector<64x128xf32>
    %c0_3 = arith.constant 0 : index
    %c0_4 = arith.constant 0 : index
    %3 = vector.load %arg4[%c0_3, %c0_4] : memref<1x128xf32, #tpu.memory_space<vmem>>, vector<1x128xf32>
    %4 = vector.broadcast %3 : vector<1x128xf32> to vector<64x128xf32>
    %5 = arith.addf %2, %4 : vector<64x128xf32>
    %cst_5 = arith.constant 0.000000e+00 : f32
    %6 = vector.broadcast %cst_5 : f32 to vector<64x128xf32>
    %7 = arith.maximumf %5, %6 : vector<64x128xf32>
    %c0_6 = arith.constant 0 : index
    %c0_7 = arith.constant 0 : index
    %8 = vector.load %arg2[%c0_6, %c0_7] : memref<8x64xf32, #tpu.memory_space<vmem>>, vector<8x64xf32>
    %cst_8 = arith.constant dense<0.000000e+00> : vector<8x128xf32>
    %9 = tpu.matmul %8, %7, %cst_8 {dimension_numbers = #tpu.dot_dimension_numbers<[1], [0], [0], [1], [0, 0, 1, 1], [], []>} : vector<8x64xf32>, vector<64x128xf32>, vector<8x128xf32> -> vector<8x128xf32>
    %c0_9 = arith.constant 0 : index
    %c0_10 = arith.constant 0 : index
    %10 = vector.load %arg5[%c0_9, %c0_10] : memref<128x128xf32, #tpu.memory_space<vmem>>, vector<128x128xf32>
    %cst_11 = arith.constant dense<0.000000e+00> : vector<8x128xf32>
    %11 = tpu.matmul %9, %10, %cst_11 {dimension_numbers = #tpu.dot_dimension_numbers<[1], [0], [0], [1], [0, 0, 1, 1], [], []>} : vector<8x128xf32>, vector<128x128xf32>, vector<8x128xf32> -> vector<8x128xf32>
    %c0_12 = arith.constant 0 : index
    %c0_13 = arith.constant 0 : index
    %12 = vector.load %arg6[%c0_12, %c0_13] : memref<1x128xf32, #tpu.memory_space<vmem>>, vector<1x128xf32>
    %13 = vector.broadcast %12 : vector<1x128xf32> to vector<8x128xf32>
    %14 = arith.addf %11, %13 : vector<8x128xf32>
    %c0_14 = arith.constant 0 : index
    %c0_15 = arith.constant 0 : index
    %15 = vector.load %arg7[%c0_14, %c0_15] : memref<8x128xf32, #tpu.memory_space<vmem>>, vector<8x128xf32>
    tpu.vector_store %arg7[%c0_14, %c0_15], %14 {strides = array<i32>} : memref<8x128xf32, #tpu.memory_space<vmem>>, vector<8x128xf32>,
    return
  }
  func.func @transform_0(%arg0: i32) -> (i32, i32) {
    %c0_i32 = arith.constant 0 : i32
    %c0_i32_0 = arith.constant 0 : i32
    return %arg0, %c0_i32 : i32, i32
  }
  func.func @transform_1(%arg0: i32) -> (i32, i32) {
    %c0_i32 = arith.constant 0 : i32
    %c0_i32_0 = arith.constant 0 : i32
    return %arg0, %c0_i32 : i32, i32
  }
  func.func @transform_2(%arg0: i32) -> (i32, i32) {
    %c0_i32 = arith.constant 0 : i32
    %c0_i32_0 = arith.constant 0 : i32
    %c0_i32_1 = arith.constant 0 : i32
    return %c0_i32, %c0_i32_0 : i32, i32
  }
  func.func @transform_3(%arg0: i32) -> (i32, i32) {
    %c0_i32 = arith.constant 0 : i32
    %c0_i32_0 = arith.constant 0 : i32
    %c0_i32_1 = arith.constant 0 : i32
    return %c0_i32, %c0_i32_0 : i32, i32
  }
  func.func @transform_4(%arg0: i32) -> (i32, i32) {
    %c0_i32 = arith.constant 0 : i32
    %c0_i32_0 = arith.constant 0 : i32
    %c0_i32_1 = arith.constant 0 : i32
    return %c0_i32, %c0_i32_0 : i32, i32
  }
  func.func @transform_5(%arg0: i32) -> (i32, i32) {
    %c0_i32 = arith.constant 0 : i32
    %c0_i32_0 = arith.constant 0 : i32
    %c0_i32_1 = arith.constant 0 : i32
    return %c0_i32, %c0_i32_0 : i32, i32
  }
  func.func @transform_6(%arg0: i32) -> (i32, i32) {
    %c0_i32 = arith.constant 0 : i32
    %c0_i32_0 = arith.constant 0 : i32
    return %arg0, %c0_i32 : i32, i32
  }
}

</mosaic_0001>

<llo_original>
// kernel: tpu_custom_call.1
$region0: #{tpu_custom_call.1}
  #allocation0 [shape = 'u32[]', space=smem, size = 0x4, offset = 0x4, fixed_abs, tag = 'smem constant byte address 0x4 - core index']
  #allocation1 [shape = 'u32[144,128]{1,0:T(1,128)}', space=vmem, size = 0x12000, scoped, tag = 'internal scratch']
  %s0 = inlined_call_operand.hbm [shape: f32[64,128], index: 0, kind: input, shape index: {}]
  %s1 = inlined_call_operand.hbm [shape: f32[8,64], index: 1, kind: input, shape index: {}]
  %s2 = inlined_call_operand.hbm [shape: f32[128,128], index: 2, kind: input, shape index: {}]
  %s3 = inlined_call_operand.vmem [shape: f32[1,128], index: 3, kind: input, shape index: {}]
  %s4 = inlined_call_operand.hbm [shape: f32[128,128], index: 4, kind: input, shape index: {}]
  %s5 = inlined_call_operand.vmem [shape: f32[1,128], index: 5, kind: input, shape index: {}]
  %s6 = inlined_call_operand.hbm [shape: f32[8,128], index: 6, kind: output, shape index: {}]
  %s7 = sld [smem:[#allocation0]]
  $region50: #{tpu_custom_call.1} parent=0
    _
  %s9 = ssub.s32 1, %s7
  %s10 = scalar_select 0, %s9, %s7
  $region1: #{tpu_custom_call.1} parent=0
    #allocation2 [shape = 'u8[32768]{0}', space=vmem, size = 0x8000, scoped, tag = 'input window, operand 0, single buffered']
    #allocation3 [shape = 's32[1]{0}', space=sflag, size = 0x4, scoped, tag = 'scoped memory for tpu_custom_call.1']
    #allocation4 [shape = 's32[1]{0}', space=sflag, size = 0x4, scoped, tag = 'scoped memory for tpu_custom_call.1']
    #allocation5 [shape = 'u8[4096]{0}', space=vmem, size = 0x1000, scoped, tag = 'input window, operand 1, single buffered']
    #allocation6 [shape = 's32[1]{0}', space=sflag, size = 0x4, scoped, tag = 'scoped memory for tpu_custom_call.1']
    #allocation7 [shape = 'u8[65536]{0}', space=vmem, size = 0x10000, scoped, tag = 'input window, operand 2, single buffered']
    #allocation8 [shape = 'u8[65536]{0}', space=vmem, size = 0x10000, scoped, tag = 'input window, operand 4, single buffered']
    #allocation9 [shape = 's32[1]{0}', space=sflag, size = 0x4, scoped, tag = 'scoped memory for tpu_custom_call.1']
    #allocation10 [shape = 'u8[4096]{0}', space=vmem, size = 0x1000, scoped, tag = 'output window, operand 0, single buffered']
    %11 = vsyncpa [#allocation3], 0
    %12 = vsyncpa [#allocation6], 0
    %13 = vsyncpa [#allocation9], 0
    %14 = vsyncpa [#allocation4], 0
    // Predicated region
    $region2: #{tpu_custom_call.1} parent=1 // pred_check
      _
    $region3: #{tpu_custom_call.1} parent=1 // pred_check_branch
      %16 = sbr.rel (0) target = $region5
    $region4: #{tpu_custom_call.1} parent=1 // pred_region
      %s18 = ssub.s32 1024, 1024
      %19 = vsyncadd [#allocation3], %s18
      %s20 = sshll.u32 [#allocation2], 4
      %s21 = int_to_ptr.vmem [resolvable:$true] %s20
      %26 = dma.hbm_to_vmem [thread:$0]  %s0, 1024, %s21, [#allocation3], 128, 128, 8
    $region5: #{tpu_custom_call.1} parent=1 // pred_fallthru
      _
    // Predicated region
    $region6: #{tpu_custom_call.1} parent=1 // pred_check
      _
    $region7: #{tpu_custom_call.1} parent=1 // pred_check_branch
      %28 = sbr.rel (0) target = $region9
    $region8: #{tpu_custom_call.1} parent=1 // pred_region
      %s30 = ssub.s32 128, 128
      %31 = vsyncadd [#allocation6], %s30
      %s33 = sshll.u32 [#allocation5], 4
      %s34 = int_to_ptr.vmem [resolvable:$true] %s33
      %36 = dma.hbm_to_vmem [thread:$0]  %s1, 128, %s34, [#allocation6]
    $region9: #{tpu_custom_call.1} parent=1 // pred_fallthru
      _
    // Predicated region
    $region10: #{tpu_custom_call.1} parent=1 // pred_check
      _
    $region11: #{tpu_custom_call.1} parent=1 // pred_check_branch
      %38 = sbr.rel (0) target = $region13
    $region12: #{tpu_custom_call.1} parent=1 // pred_region
      %s40 = ssub.s32 2048, 2048
      %41 = vsyncadd [#allocation6], %s40
      %s42 = sshll.u32 [#allocation7], 4
      %s43 = int_to_ptr.vmem [resolvable:$true] %s42
      %48 = dma.hbm_to_vmem [thread:$0]  %s2, 2048, %s43, [#allocation6], 128, 128, 8
    $region13: #{tpu_custom_call.1} parent=1 // pred_fallthru
      _
    // Predicated region
    $region14: #{tpu_custom_call.1} parent=1 // pred_check
      _
    $region15: #{tpu_custom_call.1} parent=1 // pred_check_branch
      %50 = sbr.rel (0) target = $region17
    $region16: #{tpu_custom_call.1} parent=1 // pred_region
      _
    $region17: #{tpu_custom_call.1} parent=1 // pred_fallthru
      _
    // Predicated region
    $region18: #{tpu_custom_call.1} parent=1 // pred_check
      _
    $region19: #{tpu_custom_call.1} parent=1 // pred_check_branch
      %52 = sbr.rel (0) target = $region21
    $region20: #{tpu_custom_call.1} parent=1 // pred_region
      %s54 = ssub.s32 2048, 2048
      %55 = vsyncadd [#allocation9], %s54
      %s56 = sshll.u32 [#allocation8], 4
      %s57 = int_to_ptr.vmem [resolvable:$true] %s56
      %62 = dma.hbm_to_vmem [thread:$0]  %s4, 2048, %s57, [#allocation9], 128, 128, 8
    $region21: #{tpu_custom_call.1} parent=1 // pred_fallthru
      _
    // Predicated region
    $region22: #{tpu_custom_call.1} parent=1 // pred_check
      _
    $region23: #{tpu_custom_call.1} parent=1 // pred_check_branch
      %64 = sbr.rel (0) target = $region25
    $region24: #{tpu_custom_call.1} parent=1 // pred_region
      _
    $region25: #{tpu_custom_call.1} parent=1 // pred_fallthru
      _
    // Predicated region
    $region26: #{tpu_custom_call.1} parent=1 // pred_check
      _
    $region27: #{tpu_custom_call.1} parent=1 // pred_check_branch
      %66 = sbr.rel (0) target = $region29
    $region28: #{tpu_custom_call.1} parent=1 // pred_region
      %67 = dma.done [#allocation3], 1024
    $region29: #{tpu_custom_call.1} parent=1 // pred_fallthru
      _
    // Predicated region
    $region30: #{tpu_custom_call.1} parent=1 // pred_check
      _
    $region31: #{tpu_custom_call.1} parent=1 // pred_check_branch
      %69 = sbr.rel (0) target = $region33
    $region32: #{tpu_custom_call.1} parent=1 // pred_region
      %70 = dma.done [#allocation6], 128
    $region33: #{tpu_custom_call.1} parent=1 // pred_fallthru
      _
    // Predicated region
    $region34: #{tpu_custom_call.1} parent=1 // pred_check
      _
    $region35: #{tpu_custom_call.1} parent=1 // pred_check_branch
      %72 = sbr.rel (0) target = $region37
    $region36: #{tpu_custom_call.1} parent=1 // pred_region
      %73 = dma.done [#allocation6], 2048
    $region37: #{tpu_custom_call.1} parent=1 // pred_fallthru
      _
    // Predicated region
    $region38: #{tpu_custom_call.1} parent=1 // pred_check
      _
    $region39: #{tpu_custom_call.1} parent=1 // pred_check_branch
      %75 = sbr.rel (0) target = $region41
    $region40: #{tpu_custom_call.1} parent=1 // pred_region
      %76 = dma.done [#allocation9], 2048
    $region41: #{tpu_custom_call.1} parent=1 // pred_fallthru
      _
    %v77 = vld [vmem:[#allocation2] sm:$0xff]
    %v78 = vld [vmem:[#allocation2 + $0x8] sm:$0xff]
    %v79 = vld [vmem:[#allocation2 + $0x10] sm:$0xff]
    %v80 = vld [vmem:[#allocation2 + $0x18] sm:$0xff]
    %v81 = vld [vmem:[#allocation2 + $0x20] sm:$0xff]
    %v82 = vld [vmem:[#allocation2 + $0x28] sm:$0xff]
    %v83 = vld [vmem:[#allocation2 + $0x30] sm:$0xff]
    %v84 = vld [vmem:[#allocation2 + $0x38] sm:$0xff]
    %v85 = vld [vmem:[#allocation7] sm:$0xff]
    %v86 = vld [vmem:[#allocation7 + $0x8] sm:$0xff]
    %v87 = vld [vmem:[#allocation7 + $0x10] sm:$0xff]
    %v88 = vld [vmem:[#allocation7 + $0x18] sm:$0xff]
    %v89 = vld [vmem:[#allocation7 + $0x20] sm:$0xff]
    %v90 = vld [vmem:[#allocation7 + $0x28] sm:$0xff]
    %v91 = vld [vmem:[#allocation7 + $0x30] sm:$0xff]
    %v92 = vld [vmem:[#allocation7 + $0x38] sm:$0xff]
    %v93 = vld [vmem:[#allocation7 + $0x40] sm:$0xff]
    %v94 = vld [vmem:[#allocation7 + $0x48] sm:$0xff]
    %v95 = vld [vmem:[#allocation7 + $0x50] sm:$0xff]
    %v96 = vld [vmem:[#allocation7 + $0x58] sm:$0xff]
    %v97 = vld [vmem:[#allocation7 + $0x60] sm:$0xff]
    %v98 = vld [vmem:[#allocation7 + $0x68] sm:$0xff]
    %v99 = vld [vmem:[#allocation7 + $0x70] sm:$0xff]
    %v100 = vld [vmem:[#allocation7 + $0x78] sm:$0xff]
    %v101 = vld [vmem:[%s3] sm:$0x1]
    %v103 = vlaneseq
    %v104 = vshrl.u32 %v103, 7
    %v105 = vsub.s32 0, %v104
    %v106 = vrot.slane %v101, %v105
    %108 = vmatprep.subr.mxu0 0.0
    %109 = vmatpush1.msra.mxu0 %v85
    %110 = vmatprep.subr.mxu0 0.0
    %111 = vmatpush1.msra.mxu0 %v86
    %112 = vmatprep.subr.mxu0 0.0
    %113 = vmatpush1.msra.mxu0 %v87
    %114 = vmatprep.subr.mxu0 0.0
    %115 = vmatpush1.msra.mxu0 %v88
    %116 = vmatprep.subr.mxu0 0.0
    %117 = vmatpush1.msra.mxu0 %v89
    %118 = vmatprep.subr.mxu0 0.0
    %119 = vmatpush1.msra.mxu0 %v90
    %120 = vmatprep.subr.mxu0 0.0
    %121 = vmatpush1.msra.mxu0 %v91
    %122 = vmatprep.subr.mxu0 0.0
    %123 = vmatpush1.msra.mxu0 %v92
    %124 = vmatprep.subr.mxu0 0.0
    %125 = vmatpush1.msra.mxu0 %v93
    %126 = vmatprep.subr.mxu0 0.0
    %127 = vmatpush1.msra.mxu0 %v94
    %128 = vmatprep.subr.mxu0 0.0
    %129 = vmatpush1.msra.mxu0 %v95
    %130 = vmatprep.subr.mxu0 0.0
    %131 = vmatpush1.msra.mxu0 %v96
    %132 = vmatprep.subr.mxu0 0.0
    %133 = vmatpush1.msra.mxu0 %v97
    %134 = vmatprep.subr.mxu0 0.0
    %135 = vmatpush1.msra.mxu0 %v98
    %136 = vmatprep.subr.mxu0 0.0
    %137 = vmatpush1.msra.mxu0 %v99
    %138 = vmatprep.subr.mxu0 0.0
    %139 = vmatpush1.msra.mxu0 %v100
    %140 = vmatprep.subr.mxu0 0.0
    %141 = vmatpush1.msra.mxu0 0.0
    %142 = vmatprep.subr.mxu0 0.0
    %143 = vmatpush1.msra.mxu0 0.0
    %144 = vmatprep.subr.mxu0 0.0
    %145 = vmatpush1.msra.mxu0 0.0
    %146 = vmatprep.subr.mxu0 0.0
    %147 = vmatpush1.msra.mxu0 0.0
    %148 = vmatprep.subr.mxu0 0.0
    %149 = vmatpush1.msra.mxu0 0.0
    %150 = vmatprep.subr.mxu0 0.0
    %151 = vmatpush1.msra.mxu0 0.0
    %152 = vmatprep.subr.mxu0 0.0
    %153 = vmatpush1.msra.mxu0 0.0
    %154 = vmatprep.subr.mxu0 0.0
    %155 = vmatpush1.msra.mxu0 0.0
    %156 = vmatprep.subr.mxu0 0.0
    %157 = vmatpush1.msra.mxu0 0.0
    %158 = vmatprep.subr.mxu0 0.0
    %159 = vmatpush1.msra.mxu0 0.0
    %160 = vmatprep.subr.mxu0 0.0
    %161 = vmatpush1.msra.mxu0 0.0
    %162 = vmatprep.subr.mxu0 0.0
    %163 = vmatpush1.msra.mxu0 0.0
    %164 = vmatprep.subr.mxu0 0.0
    %165 = vmatpush1.msra.mxu0 0.0
    %166 = vmatprep.subr.mxu0 0.0
    %167 = vmatpush1.msra.mxu0 0.0
    %168 = vmatprep.subr.mxu0 0.0
    %169 = vmatpush1.msra.mxu0 0.0
    %170 = vmatprep.subr.mxu0 0.0
    %171 = vmatpush1.msra.mxu0 0.0
    %172 = vmatprep.mubr.f32.mxu0 0.0
    %173 = vmatmul.mubr.f32.gmra.mrb[0].mxu0 %v77
    %v174 = vpop.f32.mrb[0].mxu0
    %v175 = vadd.f32 %v106, %v174
    %v176 = vpop.f32.mrb[0].mxu0
    %177 = vmatprep.mubr.f32.mxu0 0.0
    %178 = vmatmul.mubr.f32.gmra.mrb[0].mxu0 %v78
    %v179 = vpop.f32.mrb[0].mxu0
    %v180 = vadd.f32 %v106, %v179
    %v181 = vpop.f32.mrb[0].mxu0
    %182 = vmatprep.mubr.f32.mxu0 0.0
    %183 = vmatmul.mubr.f32.gmra.mrb[0].mxu0 %v79
    %v184 = vpop.f32.mrb[0].mxu0
    %v185 = vadd.f32 %v106, %v184
    %v186 = vpop.f32.mrb[0].mxu0
    %187 = vmatprep.mubr.f32.mxu0 0.0
    %188 = vmatmul.mubr.f32.gmra.mrb[0].mxu0 %v80
    %v189 = vpop.f32.mrb[0].mxu0
    %v190 = vadd.f32 %v106, %v189
    %v191 = vpop.f32.mrb[0].mxu0
    %192 = vmatprep.mubr.f32.mxu0 0.0
    %193 = vmatmul.mubr.f32.gmra.mrb[0].mxu0 %v81
    %v194 = vpop.f32.mrb[0].mxu0
    %v195 = vadd.f32 %v106, %v194
    %v196 = vpop.f32.mrb[0].mxu0
    %197 = vmatprep.mubr.f32.mxu0 0.0
    %198 = vmatmul.mubr.f32.gmra.mrb[0].mxu0 %v82
    %v199 = vpop.f32.mrb[0].mxu0
    %v200 = vadd.f32 %v106, %v199
    %v201 = vpop.f32.mrb[0].mxu0
    %202 = vmatprep.mubr.f32.mxu0 0.0
    %203 = vmatmul.mubr.f32.gmra.mrb[0].mxu0 %v83
    %v204 = vpop.f32.mrb[0].mxu0
    %v205 = vadd.f32 %v106, %v204
    %v206 = vpop.f32.mrb[0].mxu0
    %207 = vmatprep.mubr.f32.mxu0 0.0
    %208 = vmatmul.mubr.f32.gmra.mrb[0].mxu0 %v84
    %v209 = vpop.f32.mrb[0].mxu0
    %v210 = vadd.f32 %v106, %v209
    %v211 = vpop.f32.mrb[0].mxu0
    %212 = vdwg.mxu0
    %v213 = vmax.f32 %v175, 0.0
    %v214 = vmax.f32 %v180, 0.0
    %v215 = vmax.f32 %v185, 0.0
    %v216 = vmax.f32 %v190, 0.0
    %v217 = vmax.f32 %v195, 0.0
    %v218 = vmax.f32 %v200, 0.0
    %v219 = vmax.f32 %v205, 0.0
    %v220 = vmax.f32 %v210, 0.0
    %v221 = vld [vmem:[#allocation5] sm:$0xff]
    %vm222 = vcmask 523264
    %v224 = vsel %vm222, %v221, 0
    %226 = vmatprep.subr.mxu0 0.0
    %227 = vmatpush1.msra.mxu0 %v213
    %228 = vmatprep.subr.mxu0 0.0
    %229 = vmatpush1.msra.mxu0 %v214
    %230 = vmatprep.subr.mxu0 0.0
    %231 = vmatpush1.msra.mxu0 %v215
    %232 = vmatprep.subr.mxu0 0.0
    %233 = vmatpush1.msra.mxu0 %v216
    %234 = vmatprep.subr.mxu0 0.0
    %235 = vmatpush1.msra.mxu0 %v217
    %236 = vmatprep.subr.mxu0 0.0
    %237 = vmatpush1.msra.mxu0 %v218
    %238 = vmatprep.subr.mxu0 0.0
    %239 = vmatpush1.msra.mxu0 %v219
    %240 = vmatprep.subr.mxu0 0.0
    %241 = vmatpush1.msra.mxu0 %v220
    %242 = vmatprep.subr.mxu0 0.0
    %243 = vmatpush1.msra.mxu0 0.0
    %244 = vmatprep.subr.mxu0 0.0
    %245 = vmatpush1.msra.mxu0 0.0
    %246 = vmatprep.subr.mxu0 0.0
    %247 = vmatpush1.msra.mxu0 0.0
    %248 = vmatprep.subr.mxu0 0.0
    %249 = vmatpush1.msra.mxu0 0.0
    %250 = vmatprep.subr.mxu0 0.0
    %251 = vmatpush1.msra.mxu0 0.0
    %252 = vmatprep.subr.mxu0 0.0
    %253 = vmatpush1.msra.mxu0 0.0
    %254 = vmatprep.subr.mxu0 0.0
    %255 = vmatpush1.msra.mxu0 0.0
    %256 = vmatprep.subr.mxu0 0.0
    %257 = vmatpush1.msra.mxu0 0.0
    %258 = vmatprep.subr.mxu0 0.0
    %259 = vmatpush1.msra.mxu0 0.0
    %260 = vmatprep.subr.mxu0 0.0
    %261 = vmatpush1.msra.mxu0 0.0
    %262 = vmatprep.subr.mxu0 0.0
    %263 = vmatpush1.msra.mxu0 0.0
    %264 = vmatprep.subr.mxu0 0.0
    %265 = vmatpush1.msra.mxu0 0.0
    %266 = vmatprep.subr.mxu0 0.0
    %267 = vmatpush1.msra.mxu0 0.0
    %268 = vmatprep.subr.mxu0 0.0
    %269 = vmatpush1.msra.mxu0 0.0
    %270 = vmatprep.subr.mxu0 0.0
    %271 = vmatpush1.msra.mxu0 0.0
    %272 = vmatprep.subr.mxu0 0.0
    %273 = vmatpush1.msra.mxu0 0.0
    %274 = vmatprep.subr.mxu0 0.0
    %275 = vmatpush1.msra.mxu0 0.0
    %276 = vmatprep.subr.mxu0 0.0
    %277 = vmatpush1.msra.mxu0 0.0
    %278 = vmatprep.subr.mxu0 0.0
    %279 = vmatpush1.msra.mxu0 0.0
    %280 = vmatprep.subr.mxu0 0.0
    %281 = vmatpush1.msra.mxu0 0.0
    %282 = vmatprep.subr.mxu0 0.0
    %283 = vmatpush1.msra.mxu0 0.0
    %284 = vmatprep.subr.mxu0 0.0
    %285 = vmatpush1.msra.mxu0 0.0
    %286 = vmatprep.subr.mxu0 0.0
    %287 = vmatpush1.msra.mxu0 0.0
    %288 = vmatprep.subr.mxu0 0.0
    %289 = vmatpush1.msra.mxu0 0.0
    %290 = vmatprep.mubr.f32.mxu0 0.0
    %291 = vmatmul.mubr.f32.gmra.mrb[0].mxu0 %v224
    %v292 = vpop.f32.mrb[0].mxu0
    %v293 = vadd.f32 0.0, %v292
    %v294 = vpop.f32.mrb[0].mxu0
    %295 = vdwg.mxu0
    %v296 = vld [vmem:[#allocation8] sm:$0xff]
    %v297 = vld [vmem:[#allocation8 + $0x8] sm:$0xff]
    %v298 = vld [vmem:[#allocation8 + $0x10] sm:$0xff]
    %v299 = vld [vmem:[#allocation8 + $0x18] sm:$0xff]
    %v300 = vld [vmem:[#allocation8 + $0x20] sm:$0xff]
    %v301 = vld [vmem:[#allocation8 + $0x28] sm:$0xff]
    %v302 = vld [vmem:[#allocation8 + $0x30] sm:$0xff]
    %v303 = vld [vmem:[#allocation8 + $0x38] sm:$0xff]
    %v304 = vld [vmem:[#allocation8 + $0x40] sm:$0xff]
    %v305 = vld [vmem:[#allocation8 + $0x48] sm:$0xff]
    %v306 = vld [vmem:[#allocation8 + $0x50] sm:$0xff]
    %v307 = vld [vmem:[#allocation8 + $0x58] sm:$0xff]
    %v308 = vld [vmem:[#allocation8 + $0x60] sm:$0xff]
    %v309 = vld [vmem:[#allocation8 + $0x68] sm:$0xff]
    %v310 = vld [vmem:[#allocation8 + $0x70] sm:$0xff]
    %v311 = vld [vmem:[#allocation8 + $0x78] sm:$0xff]
    %v312 = vld [vmem:[%s5] sm:$0x1]
    %v314 = vlaneseq
    %v315 = vshrl.u32 %v314, 7
    %v316 = vsub.s32 0, %v315
    %v317 = vrot.slane %v312, %v316
    %319 = vmatprep.subr.mxu0 0.0
    %320 = vmatpush1.msra.mxu0 %v296
    %321 = vmatprep.subr.mxu0 0.0
    %322 = vmatpush1.msra.mxu0 %v297
    %323 = vmatprep.subr.mxu0 0.0
    %324 = vmatpush1.msra.mxu0 %v298
    %325 = vmatprep.subr.mxu0 0.0
    %326 = vmatpush1.msra.mxu0 %v299
    %327 = vmatprep.subr.mxu0 0.0
    %328 = vmatpush1.msra.mxu0 %v300
    %329 = vmatprep.subr.mxu0 0.0
    %330 = vmatpush1.msra.mxu0 %v301
    %331 = vmatprep.subr.mxu0 0.0
    %332 = vmatpush1.msra.mxu0 %v302
    %333 = vmatprep.subr.mxu0 0.0
    %334 = vmatpush1.msra.mxu0 %v303
    %335 = vmatprep.subr.mxu0 0.0
    %336 = vmatpush1.msra.mxu0 %v304
    %337 = vmatprep.subr.mxu0 0.0
    %338 = vmatpush1.msra.mxu0 %v305
    %339 = vmatprep.subr.mxu0 0.0
    %340 = vmatpush1.msra.mxu0 %v306
    %341 = vmatprep.subr.mxu0 0.0
    %342 = vmatpush1.msra.mxu0 %v307
    %343 = vmatprep.subr.mxu0 0.0
    %344 = vmatpush1.msra.mxu0 %v308
    %345 = vmatprep.subr.mxu0 0.0
    %346 = vmatpush1.msra.mxu0 %v309
    %347 = vmatprep.subr.mxu0 0.0
    %348 = vmatpush1.msra.mxu0 %v310
    %349 = vmatprep.subr.mxu0 0.0
    %350 = vmatpush1.msra.mxu0 %v311
    %351 = vmatprep.subr.mxu0 0.0
    %352 = vmatpush1.msra.mxu0 0.0
    %353 = vmatprep.subr.mxu0 0.0
    %354 = vmatpush1.msra.mxu0 0.0
    %355 = vmatprep.subr.mxu0 0.0
    %356 = vmatpush1.msra.mxu0 0.0
    %357 = vmatprep.subr.mxu0 0.0
    %358 = vmatpush1.msra.mxu0 0.0
    %359 = vmatprep.subr.mxu0 0.0
    %360 = vmatpush1.msra.mxu0 0.0
    %361 = vmatprep.subr.mxu0 0.0
    %362 = vmatpush1.msra.mxu0 0.0
    %363 = vmatprep.subr.mxu0 0.0
    %364 = vmatpush1.msra.mxu0 0.0
    %365 = vmatprep.subr.mxu0 0.0
    %366 = vmatpush1.msra.mxu0 0.0
    %367 = vmatprep.subr.mxu0 0.0
    %368 = vmatpush1.msra.mxu0 0.0
    %369 = vmatprep.subr.mxu0 0.0
    %370 = vmatpush1.msra.mxu0 0.0
    %371 = vmatprep.subr.mxu0 0.0
    %372 = vmatpush1.msra.mxu0 0.0
    %373 = vmatprep.subr.mxu0 0.0
    %374 = vmatpush1.msra.mxu0 0.0
    %375 = vmatprep.subr.mxu0 0.0
    %376 = vmatpush1.msra.mxu0 0.0
    %377 = vmatprep.subr.mxu0 0.0
    %378 = vmatpush1.msra.mxu0 0.0
    %379 = vmatprep.subr.mxu0 0.0
    %380 = vmatpush1.msra.mxu0 0.0
    %381 = vmatprep.subr.mxu0 0.0
    %382 = vmatpush1.msra.mxu0 0.0
    %383 = vmatprep.mubr.f32.mxu0 0.0
    %384 = vmatmul.mubr.f32.gmra.mrb[0].mxu0 %v293
    %v385 = vpop.f32.mrb[0].mxu0
    %v386 = vadd.f32 %v317, %v385
    %v387 = vpop.f32.mrb[0].mxu0
    %388 = vdwg.mxu0
    %389 = vst [vmem:[#allocation10] sm:$0xff] %v386
    // Predicated region
    $region42: #{tpu_custom_call.1} parent=1 // pred_check
      _
    $region43: #{tpu_custom_call.1} parent=1 // pred_check_branch
      %391 = sbr.rel (0) target = $region45
    $region44: #{tpu_custom_call.1} parent=1 // pred_region
      %s393 = ssub.s32 128, 128
      %394 = vsyncadd [#allocation4], %s393
      %s396 = sshll.u32 [#allocation10], 4
      %s397 = int_to_ptr.vmem [resolvable:$true] %s396
      %399 = dma.vmem_to_hbm [thread:$0]  %s397, 128, %s6, [#allocation4]
    $region45: #{tpu_custom_call.1} parent=1 // pred_fallthru
      _
    // Predicated region
    $region46: #{tpu_custom_call.1} parent=1 // pred_check
      _
    $region47: #{tpu_custom_call.1} parent=1 // pred_check_branch
      %401 = sbr.rel (0) target = $region49
    $region48: #{tpu_custom_call.1} parent=1 // pred_region
      %402 = dma.done [#allocation4], 128
    $region49: #{tpu_custom_call.1} parent=1 // pred_fallthru
      _
    %403 = vsyncpa [#allocation3], 1
    %404 = vsyncpa [#allocation6], 1
    %405 = vsyncpa [#allocation9], 1
    %406 = vsyncpa [#allocation4], 1

</llo_original>
